<compile_context>
chip_gen: v6e
topology: v6e:2x2x1
jax: 0.10.0
libtpu: 0.0.40
codegen_flags: <defaults>
</compile_context>

<pallas_src>
import functools

import jax
import jax.numpy as jnp
from jax.experimental import pallas as pl
from jax.experimental.pallas import tpu as pltpu


def _encoder_norm_kernel(x_ref, alpha_ref, bias_ref, o_ref, *, eps: float, true_f: int):
    # x_ref: (row_tile, f_pad) block; alpha_ref/bias_ref: (1, f_pad)
    x = x_ref[...].astype(jnp.float32)
    f_pad = x.shape[-1]

    if true_f != f_pad:
        lane = jax.lax.broadcasted_iota(jnp.int32, x.shape, dimension=1)
        valid = lane < true_f
        xs = jnp.where(valid, x, jnp.float32(0.0))
    else:
        valid = None
        xs = x

    # mean over the true feature count only (pad lanes contribute 0 to the sum).
    mean = jnp.sum(xs, axis=-1, keepdims=True) * jnp.float32(1.0 / true_f)
    diff = xs - mean
    if valid is not None:
        diff = jnp.where(valid, diff, jnp.float32(0.0))

    # torch.std defaults to Bessel's correction (ddof=1).
    var = jnp.sum(diff * diff, axis=-1, keepdims=True) * jnp.float32(1.0 / (true_f - 1))
    std = jnp.sqrt(var)

    # One reciprocal per row on the EUP instead of F VALU divides per element.
    # approx=False so the result matches the exact-divide reference to 1e-5.
    inv = pl.reciprocal(std + jnp.float32(eps), approx=False)

    alpha = alpha_ref[...].astype(jnp.float32)  # (1, f_pad) — broadcast, no explicit tile
    bias = bias_ref[...].astype(jnp.float32)

    y = alpha * (diff * inv) + bias
    o_ref[...] = y.astype(o_ref.dtype)


def _round_up(n: int, m: int) -> int:
    return ((n + m - 1) // m) * m


def encoder_forward(x, mask, alpha, bias, *, eps=1e-6,
                    max_row_tile=1024,
                    vmem_tile_budget_bytes=24 * 1024 * 1024):
    """Encoder forward: (no layers) -> LayerNormalization over the last axis.

    x:     (B, S, F)   float32
    mask:  unused here (would be consumed by the encoder layers)
    alpha: (F,)        scale
    bias:  (F,)        shift
    """
    del mask  # only consumed by the (empty) layer stack
    b, s, f = x.shape
    rows = b * s

    # Lane-dense feature axis: pad F up to a multiple of 128 (no-op if aligned).
    f_pad = f if f % 128 == 0 else _round_up(f, 128)

    # Size the row tile from a VMEM budget:
    #   per-step VMEM ~= 2 buffers x (input tile + output tile)
    itemsize = jnp.dtype(x.dtype).itemsize
    bytes_per_row = 4 * f_pad * itemsize  # 2 bufs x (in + out)
    row_tile = max(8, min(max_row_tile, vmem_tile_budget_bytes // bytes_per_row))
    row_tile = max(8, (row_tile // 8) * 8)
    # Don't tile far past the actual row count (small inputs).
    row_tile = min(row_tile, _round_up(rows, 8))

    rows_pad = _round_up(rows, row_tile)

    x2d = x.reshape(rows, f)
    pad_r = rows_pad - rows
    pad_f = f_pad - f
    if pad_r or pad_f:
        x2d = jnp.pad(x2d, ((0, pad_r), (0, pad_f)))
    alpha2d = jnp.pad(alpha.reshape(1, f), ((0, 0), (0, pad_f))) if pad_f else alpha.reshape(1, f)
    bias2d = jnp.pad(bias.reshape(1, f), ((0, 0), (0, pad_f))) if pad_f else bias.reshape(1, f)

    kernel = functools.partial(_encoder_norm_kernel, eps=eps, true_f=f)

    out2d = pl.pallas_call(
        kernel,
        out_shape=jax.ShapeDtypeStruct((rows_pad, f_pad), x.dtype),
        grid_spec=pltpu.PrefetchScalarGridSpec(
            num_scalar_prefetch=0,
            grid=(rows_pad // row_tile,),
            in_specs=[
                pl.BlockSpec((row_tile, f_pad), lambda i: (i, 0)),
                pl.BlockSpec((1, f_pad), lambda i: (0, 0)),
                pl.BlockSpec((1, f_pad), lambda i: (0, 0)),
            ],
            out_specs=pl.BlockSpec((row_tile, f_pad), lambda i: (i, 0)),
        ),
        compiler_params=pltpu.CompilerParams(
            # "parallel" lets the grid axis shard across both TensorCores on v7x;
            # it is a no-op on v5e/v6e.
            dimension_semantics=("parallel",),
            # Explicit scoped-VMEM limit with headroom for v7x's 64 MiB VMEM;
            # tiles are budgeted to ~24 MiB double-buffered.
            vmem_limit_bytes=32 * 1024 * 1024,
        ),
    )(x2d, alpha2d, bias2d)

    if pad_r or pad_f:
        out2d = out2d[:rows, :f]
    return out2d.reshape(b, s, f)


def _reference(x, alpha, bias, eps=1e-6):
    mean = jnp.mean(x, axis=-1, keepdims=True)
    std = jnp.std(x, axis=-1, keepdims=True, ddof=1)  # torch unbiased std
    return alpha * (x - mean) / (std + eps) + bias


if __name__ == "__main__":
    key = jax.random.PRNGKey(0)
    kx, km = jax.random.split(key)

    B, S, F = 2, 8, 32
    x = jax.random.normal(kx, (B, S, F), dtype=jnp.float32)
    # mask would be (B, 1, S, S) for self-attention layers; unused here.
    mask = jnp.ones((B, 1, S, S), dtype=jnp.float32)

    # Deterministic parameter init matching LayerNormalization.__init__:
    alpha = jnp.ones((F,), dtype=jnp.float32)   # torch.ones(features)
    bias = jnp.zeros((F,), dtype=jnp.float32)   # torch.zeros(features)

    out = encoder_forward(x, mask, alpha, bias)
    out = jax.block_until_ready(out)

    ref = _reference(x, alpha, bias)
    assert out.shape == (B, S, F)
    assert jnp.allclose(out, ref, atol=1e-5, rtol=1e-5), "mismatch vs reference"

    print("KERNEL_OK")
</pallas_src>

<mosaic_0001>
module attributes {stable_mosaic.version = 11 : i64} {
  func.func @_encoder_norm_kernel(%arg0: i32, %arg1: memref<16x128xf32, #tpu.memory_space<vmem>>, %arg2: memref<1x128xf32, #tpu.memory_space<vmem>>, %arg3: memref<1x128xf32, #tpu.memory_space<vmem>>, %arg4: memref<16x128xf32, #tpu.memory_space<vmem>>) attributes {dimension_semantics = [#tpu.dimension_semantics<parallel>], iteration_bounds = array<i64: 1>, scalar_prefetch = 0 : i64, scratch_operands = 0 : i64, tpu.core_type = #tpu.core_type<tc>, window_params = [{transform_indices = @transform_0, window_bounds = array<i64: 16, 128>}, {pipeline_mode = #tpu.pipeline_mode<synchronous>, transform_indices = @transform_1, window_bounds = array<i64: 1, 128>}, {pipeline_mode = #tpu.pipeline_mode<synchronous>, transform_indices = @transform_2, window_bounds = array<i64: 1, 128>}, {transform_indices = @transform_3, window_bounds = array<i64: 16, 128>}]} {
    %c0 = arith.constant 0 : index
    %c0_0 = arith.constant 0 : index
    %0 = vector.load %arg1[%c0, %c0_0] : memref<16x128xf32, #tpu.memory_space<vmem>>, vector<16x128xf32>
    %1 = tpu.iota {dimensions = array<i32: 1>} : vector<16x128xi32>
    %c32_i32 = arith.constant 32 : i32
    %2 = vector.broadcast %c32_i32 : i32 to vector<16x128xi32>
    %3 = arith.cmpi slt, %1, %2 : vector<16x128xi32>
    %cst = arith.constant 0.000000e+00 : f32
    %4 = vector.broadcast %cst : f32 to vector<16x128xf32>
    %5 = arith.select %3, %0, %4 : vector<16x128xi1>, vector<16x128xf32>
    %cst_1 = arith.constant dense<0.000000e+00> : vector<16xf32>
    %6 = vector.multi_reduction <add>, %5, %cst_1 [1] : vector<16x128xf32> to vector<16xf32>
    %7 = vector.shape_cast %6 : vector<16xf32> to vector<16x1xf32>
    %cst_2 = arith.constant 3.125000e-02 : f32
    %8 = vector.broadcast %cst_2 : f32 to vector<16x1xf32>
    %9 = arith.mulf %7, %8 : vector<16x1xf32>
    %10 = vector.broadcast %9 : vector<16x1xf32> to vector<16x128xf32>
    %11 = arith.subf %5, %10 : vector<16x128xf32>
    %cst_3 = arith.constant 0.000000e+00 : f32
    %12 = vector.broadcast %cst_3 : f32 to vector<16x128xf32>
    %13 = arith.select %3, %11, %12 : vector<16x128xi1>, vector<16x128xf32>
    %14 = arith.mulf %13, %13 : vector<16x128xf32>
    %cst_4 = arith.constant dense<0.000000e+00> : vector<16xf32>
    %15 = vector.multi_reduction <add>, %14, %cst_4 [1] : vector<16x128xf32> to vector<16xf32>
    %16 = vector.shape_cast %15 : vector<16xf32> to vector<16x1xf32>
    %cst_5 = arith.constant 0.0322580636 : f32
    %17 = vector.broadcast %cst_5 : f32 to vector<16x1xf32>
    %18 = arith.mulf %16, %17 : vector<16x1xf32>
    %19 = math.sqrt %18 : vector<16x1xf32>
    %cst_6 = arith.constant 9.99999997E-7 : f32
    %20 = vector.broadcast %cst_6 : f32 to vector<16x1xf32>
    %21 = arith.addf %19, %20 : vector<16x1xf32>
    %22 = tpu.reciprocal %21 : vector<16x1xf32> -> vector<16x1xf32>
    %c0_7 = arith.constant 0 : index
    %c0_8 = arith.constant 0 : index
    %23 = vector.load %arg2[%c0_7, %c0_8] : memref<1x128xf32, #tpu.memory_space<vmem>>, vector<1x128xf32>
    %c0_9 = arith.constant 0 : index
    %c0_10 = arith.constant 0 : index
    %24 = vector.load %arg3[%c0_9, %c0_10] : memref<1x128xf32, #tpu.memory_space<vmem>>, vector<1x128xf32>
    %25 = vector.broadcast %22 : vector<16x1xf32> to vector<16x128xf32>
    %26 = arith.mulf %13, %25 : vector<16x128xf32>
    %27 = vector.broadcast %23 : vector<1x128xf32> to vector<16x128xf32>
    %28 = arith.mulf %27, %26 : vector<16x128xf32>
    %29 = vector.broadcast %24 : vector<1x128xf32> to vector<16x128xf32>
    %30 = arith.addf %28, %29 : vector<16x128xf32>
    %c0_11 = arith.constant 0 : index
    %c0_12 = arith.constant 0 : index
    %31 = vector.load %arg4[%c0_11, %c0_12] : memref<16x128xf32, #tpu.memory_space<vmem>>, vector<16x128xf32>
    tpu.vector_store %arg4[%c0_11, %c0_12], %30 {strides = array<i32>} : memref<16x128xf32, #tpu.memory_space<vmem>>, vector<16x128xf32>,
    return
  }
  func.func @transform_0(%arg0: i32) -> (i32, i32) {
    %c0_i32 = arith.constant 0 : i32
    %c0_i32_0 = arith.constant 0 : i32
    return %arg0, %c0_i32 : i32, i32
  }
  func.func @transform_1(%arg0: i32) -> (i32, i32) {
    %c0_i32 = arith.constant 0 : i32
    %c0_i32_0 = arith.constant 0 : i32
    %c0_i32_1 = arith.constant 0 : i32
    return %c0_i32, %c0_i32_0 : i32, i32
  }
  func.func @transform_2(%arg0: i32) -> (i32, i32) {
    %c0_i32 = arith.constant 0 : i32
    %c0_i32_0 = arith.constant 0 : i32
    %c0_i32_1 = arith.constant 0 : i32
    return %c0_i32, %c0_i32_0 : i32, i32
  }
  func.func @transform_3(%arg0: i32) -> (i32, i32) {
    %c0_i32 = arith.constant 0 : i32
    %c0_i32_0 = arith.constant 0 : i32
    return %arg0, %c0_i32 : i32, i32
  }
}

</mosaic_0001>

<llo_original>
// kernel: tpu_custom_call.1
$region0: #{tpu_custom_call.1}
  #allocation0 [shape = 'u32[]', space=smem, size = 0x4, offset = 0x4, fixed_abs, tag = 'smem constant byte address 0x4 - core index']
  #allocation1 [shape = 'u32[144,128]{1,0:T(1,128)}', space=vmem, size = 0x12000, scoped, tag = 'internal scratch']
  %s0 = inlined_call_operand.hbm [shape: f32[16,128], index: 0, kind: input, shape index: {}]
  %s1 = inlined_call_operand.vmem [shape: f32[1,128], index: 1, kind: input, shape index: {}]
  %s2 = inlined_call_operand.vmem [shape: f32[1,128], index: 2, kind: input, shape index: {}]
  %s3 = inlined_call_operand.hbm [shape: f32[16,128], index: 3, kind: output, shape index: {}]
  %s4 = sld [smem:[#allocation0]]
  $region26: #{tpu_custom_call.1} parent=0
    _
  %s6 = ssub.s32 1, %s4
  %s7 = scalar_select 0, %s6, %s4
  $region1: #{tpu_custom_call.1} parent=0
    #allocation2 [shape = 'u8[8192]{0}', space=vmem, size = 0x2000, scoped, tag = 'input window, operand 0, single buffered']
    #allocation3 [shape = 's32[1]{0}', space=sflag, size = 0x4, scoped, tag = 'scoped memory for tpu_custom_call.1']
    #allocation4 [shape = 's32[1]{0}', space=sflag, size = 0x4, scoped, tag = 'scoped memory for tpu_custom_call.1']
    #allocation5 [shape = 'u8[8192]{0}', space=vmem, size = 0x2000, scoped, tag = 'output window, operand 0, single buffered']
    %8 = vsyncpa [#allocation3], 0
    %9 = vsyncpa [#allocation4], 0
    // Predicated region
    $region2: #{tpu_custom_call.1} parent=1 // pred_check
      _
    $region3: #{tpu_custom_call.1} parent=1 // pred_check_branch
      %11 = sbr.rel (0) target = $region5
    $region4: #{tpu_custom_call.1} parent=1 // pred_region
      %s13 = ssub.s32 256, 256
      %14 = vsyncadd [#allocation3], %s13
      %s15 = sshll.u32 [#allocation2], 4
      %s16 = int_to_ptr.vmem [resolvable:$true] %s15
      %21 = dma.hbm_to_vmem [thread:$0]  %s0, 256, %s16, [#allocation3], 128, 128, 8
    $region5: #{tpu_custom_call.1} parent=1 // pred_fallthru
      _
    // Predicated region
    $region6: #{tpu_custom_call.1} parent=1 // pred_check
      _
    $region7: #{tpu_custom_call.1} parent=1 // pred_check_branch
      %23 = sbr.rel (0) target = $region9
    $region8: #{tpu_custom_call.1} parent=1 // pred_region
      _
    $region9: #{tpu_custom_call.1} parent=1 // pred_fallthru
      _
    // Predicated region
    $region10: #{tpu_custom_call.1} parent=1 // pred_check
      _
    $region11: #{tpu_custom_call.1} parent=1 // pred_check_branch
      %25 = sbr.rel (0) target = $region13
    $region12: #{tpu_custom_call.1} parent=1 // pred_region
      _
    $region13: #{tpu_custom_call.1} parent=1 // pred_fallthru
      _
    // Predicated region
    $region14: #{tpu_custom_call.1} parent=1 // pred_check
      _
    $region15: #{tpu_custom_call.1} parent=1 // pred_check_branch
      %27 = sbr.rel (0) target = $region17
    $region16: #{tpu_custom_call.1} parent=1 // pred_region
      %28 = dma.done [#allocation3], 256
    $region17: #{tpu_custom_call.1} parent=1 // pred_fallthru
      _
    %v29 = vld [vmem:[#allocation2] sm:$0xff]
    %v30 = vld [vmem:[#allocation2 + $0x8] sm:$0xff]
    %v31 = vlaneseq
    %v32 = vand.u32 %v31, 127
    %vm33 = vcmp.lt.s32.totalorder %v32, 32
    %v34 = vsel %vm33, %v29, 0.0
    %v35 = vsel %vm33, %v30, 0.0
    %36 = vadd.xlane.f32.xlu0 %v34
    %v37 = vpop.xlane.xlu0 %36
    %38 = vadd.xlane.f32.xlu0 %v35
    %v39 = vpop.xlane.xlu0 %38
    %v40 = vmul.f32 %v37, 0.03125
    %v41 = vmul.f32 %v39, 0.03125
    %v42 = vsub.f32 %v34, %v40
    %v43 = vsub.f32 %v35, %v41
    %v44 = vsel %vm33, %v42, 0.0
    %v45 = vsel %vm33, %v43, 0.0
    %v46 = vmul.f32 %v44, %v44
    %v47 = vmul.f32 %v45, %v45
    %48 = vadd.xlane.f32.xlu0 %v46
    %v49 = vpop.xlane.xlu0 %48
    %50 = vadd.xlane.f32.xlu0 %v47
    %v51 = vpop.xlane.xlu0 %50
    %v52 = vmul.f32 %v49, 0.032258064
    %v53 = vmul.f32 %v51, 0.032258064
    %v54 = vrsqrt.pop %v52
    %v55 = vmul.f32 %v52, %v54
    %vm56 = vcmp.eq.f32.partialorder %v52, inf
    %v57 = vsel %vm56, %v52, %v55
    %vm58 = vcmp.eq.f32.partialorder %v52, 0.0
    %v59 = vand.u32 %v52, 2147483648
    %v60 = vsel %vm58, %v59, %v57
    %v61 = vrsqrt.pop %v53
    %v62 = vmul.f32 %v53, %v61
    %vm63 = vcmp.eq.f32.partialorder %v53, inf
    %v64 = vsel %vm63, %v53, %v62
    %vm65 = vcmp.eq.f32.partialorder %v53, 0.0
    %v66 = vand.u32 %v53, 2147483648
    %v67 = vsel %vm65, %v66, %v64
    %v68 = vadd.f32 %v60, 1e-06
    %v69 = vadd.f32 %v67, 1e-06
    %v70 = vrcp.pop %v68
    %v71 = vrcp.pop %v69
    %v72 = vld [vmem:[%s1] sm:$0x1]
    %v73 = vld [vmem:[%s2] sm:$0x1]
    %v74 = vmul.f32 %v44, %v70
    %v75 = vmul.f32 %v45, %v71
    %v77 = vlaneseq
    %v78 = vshrl.u32 %v77, 7
    %v79 = vsub.s32 0, %v78
    %v80 = vrot.slane %v72, %v79
    %v82 = vmul.f32 %v80, %v74
    %v83 = vmul.f32 %v80, %v75
    %v85 = vlaneseq
    %v86 = vshrl.u32 %v85, 7
    %v87 = vsub.s32 0, %v86
    %v88 = vrot.slane %v73, %v87
    %v90 = vadd.f32 %v82, %v88
    %v91 = vadd.f32 %v83, %v88
    %92 = vst [vmem:[#allocation5] sm:$0xff] %v90
    %93 = vst [vmem:[#allocation5 + $0x8] sm:$0xff] %v91
    // Predicated region
    $region18: #{tpu_custom_call.1} parent=1 // pred_check
      _
    $region19: #{tpu_custom_call.1} parent=1 // pred_check_branch
      %95 = sbr.rel (0) target = $region21
    $region20: #{tpu_custom_call.1} parent=1 // pred_region
      %s97 = ssub.s32 256, 256
      %98 = vsyncadd [#allocation4], %s97
      %s99 = sshll.u32 [#allocation5], 4
      %s100 = int_to_ptr.vmem [resolvable:$true] %s99
      %105 = dma.vmem_to_hbm [thread:$0]  %s100, 256, %s3, [#allocation4], 128, 128, 8
    $region21: #{tpu_custom_call.1} parent=1 // pred_fallthru
      _
    // Predicated region
    $region22: #{tpu_custom_call.1} parent=1 // pred_check
      _
    $region23: #{tpu_custom_call.1} parent=1 // pred_check_branch
      %107 = sbr.rel (0) target = $region25
    $region24: #{tpu_custom_call.1} parent=1 // pred_region
      %108 = dma.done [#allocation4], 256
    $region25: #{tpu_custom_call.1} parent=1 // pred_fallthru
      _
    %109 = vsyncpa [#allocation3], 1
    %110 = vsyncpa [#allocation4], 1

</llo_original>
